<compile_context>
chip_gen: v7x
topology: tpu7x:2x2x1
jax: 0.10.0
libtpu: 0.0.40
codegen_flags: <defaults>
</compile_context>

<pallas_src>
import functools

import jax
import jax.numpy as jnp
from jax import lax
from jax.experimental import pallas as pl
from jax.experimental.pallas import tpu as pltpu

IGNORE_INDEX = 255

_LANE = 128
_CHUNK_ROWS = 32        # 4096 pixels per inner chunk; multiple of every sublane packing
_ACC_ROWS = 8           # rows of the per-(batch, split) resident accumulator block
_MIN_TILE_ROWS = 32
_MAX_TILE_ROWS = 1024   # 128K pixels per grid step


def _round_up(x, m):
    return -(-x // m) * m


def _vmem_capacity_bytes():
    try:
        return int(pltpu.get_tpu_info().vmem_capacity_bytes)
    except Exception:
        return 64 * 1024 * 1024  # v7x-safe fallback


def _pick_tile_rows(rows, num_classes, logit_itemsize, target_itemsize):
    """Pick spatial tile rows (multiple of 32, <= rows) and a VMEM limit."""
    vmem_cap = _vmem_capacity_bytes()
    # ~3/8 of physical VMEM for the double-buffered input blocks
    # (v5e/v6e: 48 MiB of 128 MiB; v7x: 24 MiB of 64 MiB).  Outputs are tiny.
    budget = (vmem_cap * 3) // 8
    per_row = 2 * _LANE * (num_classes * logit_itemsize + target_itemsize)
    cap_rows = max(_MIN_TILE_ROWS, (budget // per_row) // _CHUNK_ROWS * _CHUNK_ROWS)
    cap_rows = min(cap_rows, _MAX_TILE_ROWS)
    if rows <= _MIN_TILE_ROWS:
        tile_rows = _MIN_TILE_ROWS
    else:
        # Keep tile_rows <= rows so no block starts past the array; the ragged
        # last block is a standard Pallas partial block, masked in-kernel.
        tile_rows = min(cap_rows, (rows // _CHUNK_ROWS) * _CHUNK_ROWS)
    vmem_limit = min((vmem_cap * 4) // 5, per_row * tile_rows + (16 << 20))
    vmem_limit = max(vmem_limit, 32 * 1024 * 1024)
    return tile_rows, int(vmem_limit)


def _ce2d_kernel(x_ref, t_ref, sum_ref, cnt_ref, *, num_classes, chunk_rows,
                 acc_rows, rows_valid, tile_rows, tiles_per_split):
    # x_ref:   (1, C, S, 128)  logits tile (native dtype)
    # t_ref:   (1, S, 128)     targets tile (uint8 or int32)
    # sum_ref: (1, 1, 8, 128)  f32 resident partial sum of -log p[target]
    # cnt_ref: (1, 1, 8, 128)  f32 resident valid-pixel count
    h = pl.program_id(1)
    j = pl.program_id(2)

    @pl.when(j == 0)
    def _():
        sum_ref[...] = jnp.zeros_like(sum_ref)
        cnt_ref[...] = jnp.zeros_like(cnt_ref)

    # First row this grid step *logically* covers (unclamped, so overhang tiles
    # whose index_map was clamped contribute nothing via the row mask below).
    row0 = (h * tiles_per_split + j) * tile_rows
    n_chunks = tile_rows // chunk_rows

    def chunk_body(i, carry):
        sum_acc, cnt_acc = carry
        start = pl.multiple_of(i * chunk_rows, chunk_rows)

        t = t_ref[0, pl.ds(start, chunk_rows), :].astype(jnp.int32)

        # Pass 1 (native dtype -- max/select are exact): class max + target logit.
        x0 = x_ref[0, 0, pl.ds(start, chunk_rows), :]
        m = x0
        picked = jnp.where(t == 0, x0, jnp.zeros_like(x0))
        for c in range(1, num_classes):
            xc = x_ref[0, c, pl.ds(start, chunk_rows), :]
            m = jnp.maximum(m, xc)
            picked = jnp.where(t == c, xc, picked)
        m = m.astype(jnp.float32)
        picked = picked.astype(jnp.float32)

        # Pass 2: sum of exponentials (EUP does the exp; VPU just adds).
        s = jnp.zeros_like(m)
        for c in range(num_classes):
            xc = x_ref[0, c, pl.ds(start, chunk_rows), :].astype(jnp.float32)
            s = s + jnp.exp(xc - m)

        # Validity: not ignore_index AND inside the true spatial extent (masks
        # the garbage region of partial/overhang blocks).
        row_ids = row0 + start + lax.broadcasted_iota(
            jnp.int32, (chunk_rows, _LANE), 0)
        valid = (t != IGNORE_INDEX) & (row_ids < rows_valid)

        # -log softmax(x)[t] = logsumexp(x) - x[t] = m + log(s) - x[t]
        loss = m + jnp.log(s) - picked
        lsum = jnp.where(valid, loss, 0.0)
        csum = valid.astype(jnp.float32)

        # Fold the (chunk_rows,128) chunk into the (8,128) accumulators
        # (pure vreg adds: each 8-row group is exactly one f32 vreg).
        for g in range(chunk_rows // acc_rows):
            sl = slice(g * acc_rows, (g + 1) * acc_rows)
            sum_acc = sum_acc + lsum[sl]
            cnt_acc = cnt_acc + csum[sl]
        return sum_acc, cnt_acc

    zero = jnp.zeros((acc_rows, _LANE), jnp.float32)
    sum_acc, cnt_acc = lax.fori_loop(0, n_chunks, chunk_body, (zero, zero))

    sum_ref[0, 0] += sum_acc
    cnt_ref[0, 0] += cnt_acc


@jax.jit
def cross_entropy_loss_2d(inputs, targets):
    """inputs: (N, C, H, W) float logits; targets: (N, H, W) int class ids.

    Returns the scalar mean of -log_softmax(inputs, axis=1)[targets] over all
    pixels whose target != 255 (PyTorch NLLLoss2d, size_average=True).
    """
    N, C, H, W = inputs.shape
    HW = H * W

    x = inputs.reshape(N, C, HW)
    t = targets.reshape(N, HW)
    if t.dtype != jnp.uint8:          # uint8 targets are accepted as-is (v5e traffic win)
        t = t.astype(jnp.int32)

    # Pad only to the lane multiple (and to one 32-row tile for tiny images).
    hw_pad = max(_round_up(HW, _LANE), _MIN_TILE_ROWS * _LANE)
    if hw_pad != HW:
        # TODO(synk): when HW % 128 != 0 this jnp.pad is a full HBM copy of the
        # logits; avoiding it entirely would require an un-reshaped (N,C,HW)
        # in-kernel layout.
        x = jnp.pad(x, ((0, 0), (0, 0), (0, hw_pad - HW)))
        t = jnp.pad(t, ((0, 0), (0, hw_pad - HW)), constant_values=IGNORE_INDEX)

    rows = hw_pad // _LANE
    x = x.reshape(N, C, rows, _LANE)
    t = t.reshape(N, rows, _LANE)

    tile_rows, vmem_limit = _pick_tile_rows(rows, C, inputs.dtype.itemsize,
                                            t.dtype.itemsize)
    tiles_total = pl.cdiv(rows, tile_rows)
    if N == 1 and tiles_total == 1 and rows > _CHUNK_ROWS:
        # Give the second v7x TensorCore work even at batch 1: split the single
        # spatial tile in two (costs at most one extra grid step elsewhere).
        tile_rows = min((rows // _CHUNK_ROWS) * _CHUNK_ROWS,
                        _round_up(pl.cdiv(rows, 2), _CHUNK_ROWS))
        tiles_total = pl.cdiv(rows, tile_rows)

    n_splits = 2 if tiles_total >= 2 else 1
    tiles_per_split = pl.cdiv(tiles_total, n_splits)
    last_block = tiles_total - 1

    def spatial_block(h, j):
        # Clamp so overhang (h, j) pairs never request a fully out-of-bounds
        # block; their contribution is zeroed by the in-kernel row mask.
        return jnp.minimum(h * tiles_per_split + j, last_block)

    kernel = functools.partial(
        _ce2d_kernel,
        num_classes=C,
        chunk_rows=_CHUNK_ROWS,
        acc_rows=_ACC_ROWS,
        rows_valid=rows,
        tile_rows=tile_rows,
        tiles_per_split=tiles_per_split,
    )

    sums, cnts = pl.pallas_call(
        kernel,
        out_shape=[
            jax.ShapeDtypeStruct((N, n_splits, _ACC_ROWS, _LANE), jnp.float32),
            jax.ShapeDtypeStruct((N, n_splits, _ACC_ROWS, _LANE), jnp.float32),
        ],
        grid_spec=pltpu.PrefetchScalarGridSpec(
            num_scalar_prefetch=0,
            grid=(N, n_splits, tiles_per_split),
            in_specs=[
                pl.BlockSpec((1, C, tile_rows, _LANE),
                             lambda n, h, j: (n, 0, spatial_block(h, j), 0)),
                pl.BlockSpec((1, tile_rows, _LANE),
                             lambda n, h, j: (n, spatial_block(h, j), 0)),
            ],
            out_specs=[
                pl.BlockSpec((1, 1, _ACC_ROWS, _LANE), lambda n, h, j: (n, h, 0, 0)),
                pl.BlockSpec((1, 1, _ACC_ROWS, _LANE), lambda n, h, j: (n, h, 0, 0)),
            ],
        ),
        compiler_params=pltpu.CompilerParams(
            dimension_semantics=("parallel", "parallel", "arbitrary"),
            vmem_limit_bytes=vmem_limit,
        ),
    )(x, t)

    # Tiny epilogue: global sum and mean over valid pixels (size_average=True).
    return jnp.sum(sums) / jnp.sum(cnts)


def _reference_loss(inputs, targets):
    """Pure-JAX reference matching F.log_softmax(dim=1) + NLLLoss2d(ignore_index=255)."""
    logp = jax.nn.log_softmax(inputs.astype(jnp.float32), axis=1)  # (N,C,H,W)
    t = targets.astype(jnp.int32)
    valid = t != IGNORE_INDEX
    t_safe = jnp.where(valid, t, 0)
    picked = jnp.take_along_axis(logp, t_safe[:, None, :, :], axis=1)[:, 0]
    losses = jnp.where(valid, -picked, 0.0)
    return jnp.sum(losses) / jnp.sum(valid.astype(jnp.float32))


if __name__ == "__main__":
    key = jax.random.PRNGKey(0)
    k1, k2, k3, k4, k5, k6 = jax.random.split(key, 6)

    # Case 1: canonical small shape from the module (batch=2, classes=4, 16x16).
    x1 = jax.random.normal(k1, (2, 4, 16, 16), dtype=jnp.float32)
    t1 = jax.random.randint(k2, (2, 16, 16), 0, 4, dtype=jnp.int32)
    t1 = jnp.where(jax.random.bernoulli(k3, 0.1, t1.shape), IGNORE_INDEX, t1)
    out1 = jax.block_until_ready(cross_entropy_loss_2d(x1, t1))
    ref1 = jax.block_until_ready(_reference_loss(x1, t1))
    assert jnp.allclose(out1, ref1, atol=1e-5, rtol=1e-5), (out1, ref1)

    # Case 2: ragged spatial extent (HW % 128 != 0) exercising the multi-tile,
    # 2-way core-split, partial-last-block masking path.
    x2 = jax.random.normal(k4, (2, 5, 79, 81), dtype=jnp.float32)
    t2 = jax.random.randint(k5, (2, 79, 81), 0, 5, dtype=jnp.int32)
    t2 = jnp.where(jax.random.bernoulli(k6, 0.1, t2.shape), IGNORE_INDEX, t2)
    out2 = jax.block_until_ready(cross_entropy_loss_2d(x2, t2))
    ref2 = jax.block_until_ready(_reference_loss(x2, t2))
    assert jnp.allclose(out2, ref2, atol=1e-5, rtol=1e-5), (out2, ref2)

    print("KERNEL_OK")
</pallas_src>

<mosaic_0001>
module attributes {stable_mosaic.version = 11 : i64} {
  func.func @_ce2d_kernel(%arg0: i32, %arg1: i32, %arg2: i32, %arg3: memref<1x4x32x128xf32, #tpu.memory_space<vmem>>, %arg4: memref<1x32x128xi32, #tpu.memory_space<vmem>>, %arg5: memref<1x1x8x128xf32, #tpu.memory_space<vmem>>, %arg6: memref<1x1x8x128xf32, #tpu.memory_space<vmem>>) attributes {dimension_semantics = [#tpu.dimension_semantics<parallel>, #tpu.dimension_semantics<parallel>, #tpu.dimension_semantics<arbitrary>], iteration_bounds = array<i64: 2, 1, 1>, scalar_prefetch = 0 : i64, scratch_operands = 0 : i64, tpu.core_type = #tpu.core_type<tc>, window_params = [{transform_indices = @transform_0, window_bounds = array<i64: 1, 4, 32, 128>}, {transform_indices = @transform_1, window_bounds = array<i64: 1, 32, 128>}, {transform_indices = @transform_2, window_bounds = array<i64: 1, 1, 8, 128>}, {transform_indices = @transform_3, window_bounds = array<i64: 1, 1, 8, 128>}]} {
    %c0_i32 = arith.constant 0 : i32
    %0 = arith.cmpi eq, %arg2, %c0_i32 : i32
    %1 = arith.extui %0 : i1 to i32
    %c0_i32_0 = arith.constant 0 : i32
    %2 = arith.cmpi ne, %1, %c0_i32_0 : i32
    scf.if %2 {
      %cst_48 = arith.constant 0.000000e+00 : f32
      %109 = vector.broadcast %cst_48 : f32 to vector<1x1x8x128xf32>
      %c0_49 = arith.constant 0 : index
      %c0_50 = arith.constant 0 : index
      %c0_51 = arith.constant 0 : index
      %c0_52 = arith.constant 0 : index
      %110 = vector.load %arg5[%c0_49, %c0_50, %c0_51, %c0_52] : memref<1x1x8x128xf32, #tpu.memory_space<vmem>>, vector<1x1x8x128xf32>
      tpu.vector_store %arg5[%c0_49, %c0_50, %c0_51, %c0_52], %109 {strides = array<i32>} : memref<1x1x8x128xf32, #tpu.memory_space<vmem>>, vector<1x1x8x128xf32>,
      %cst_53 = arith.constant 0.000000e+00 : f32
      %111 = vector.broadcast %cst_53 : f32 to vector<1x1x8x128xf32>
      %c0_54 = arith.constant 0 : index
      %c0_55 = arith.constant 0 : index
      %c0_56 = arith.constant 0 : index
      %c0_57 = arith.constant 0 : index
      %112 = vector.load %arg6[%c0_54, %c0_55, %c0_56, %c0_57] : memref<1x1x8x128xf32, #tpu.memory_space<vmem>>, vector<1x1x8x128xf32>
      tpu.vector_store %arg6[%c0_54, %c0_55, %c0_56, %c0_57], %111 {strides = array<i32>} : memref<1x1x8x128xf32, #tpu.memory_space<vmem>>, vector<1x1x8x128xf32>,
    } else {
    }
    %c1_i32 = arith.constant 1 : i32
    %3 = arith.muli %arg1, %c1_i32 : i32
    %4 = arith.addi %3, %arg2 : i32
    %c32_i32 = arith.constant 32 : i32
    %5 = arith.muli %4, %c32_i32 : i32
    %cst = arith.constant 0.000000e+00 : f32
    %6 = vector.broadcast %cst : f32 to vector<8x128xf32>
    %c0_i32_1 = arith.constant 0 : i32
    %c32_i32_2 = arith.constant 32 : i32
    %7 = arith.muli %c0_i32_1, %c32_i32_2 : i32
    %8 = tpu.assume_multiple %7, 32 : i32
    %c0 = arith.constant 0 : index
    %9 = arith.index_cast %8 : i32 to index
    %c0_3 = arith.constant 0 : index
    %10 = vector.load %arg4[%c0, %9, %c0_3] : memref<1x32x128xi32, #tpu.memory_space<vmem>>, vector<1x32x128xi32>
    %11 = vector.shape_cast %10 : vector<1x32x128xi32> to vector<32x128xi32>
    %c0_4 = arith.constant 0 : index
    %c0_5 = arith.constant 0 : index
    %12 = arith.index_cast %8 : i32 to index
    %c0_6 = arith.constant 0 : index
    %13 = vector.load %arg3[%c0_4, %c0_5, %12, %c0_6] : memref<1x4x32x128xf32, #tpu.memory_space<vmem>>, vector<1x1x32x128xf32>
    %14 = vector.shape_cast %13 : vector<1x1x32x128xf32> to vector<32x128xf32>
    %c0_i32_7 = arith.constant 0 : i32
    %15 = vector.broadcast %c0_i32_7 : i32 to vector<32x128xi32>
    %16 = arith.cmpi eq, %11, %15 : vector<32x128xi32>
    %cst_8 = arith.constant 0.000000e+00 : f32
    %17 = vector.broadcast %cst_8 : f32 to vector<32x128xf32>
    %18 = arith.select %16, %14, %17 : vector<32x128xi1>, vector<32x128xf32>
    %c0_9 = arith.constant 0 : index
    %c1 = arith.constant 1 : index
    %19 = arith.index_cast %8 : i32 to index
    %c0_10 = arith.constant 0 : index
    %20 = vector.load %arg3[%c0_9, %c1, %19, %c0_10] : memref<1x4x32x128xf32, #tpu.memory_space<vmem>>, vector<1x1x32x128xf32>
    %21 = vector.shape_cast %20 : vector<1x1x32x128xf32> to vector<32x128xf32>
    %22 = arith.maximumf %14, %21 : vector<32x128xf32>
    %c1_i32_11 = arith.constant 1 : i32
    %23 = vector.broadcast %c1_i32_11 : i32 to vector<32x128xi32>
    %24 = arith.cmpi eq, %11, %23 : vector<32x128xi32>
    %25 = arith.select %24, %21, %18 : vector<32x128xi1>, vector<32x128xf32>
    %c0_12 = arith.constant 0 : index
    %c2 = arith.constant 2 : index
    %26 = arith.index_cast %8 : i32 to index
    %c0_13 = arith.constant 0 : index
    %27 = vector.load %arg3[%c0_12, %c2, %26, %c0_13] : memref<1x4x32x128xf32, #tpu.memory_space<vmem>>, vector<1x1x32x128xf32>
    %28 = vector.shape_cast %27 : vector<1x1x32x128xf32> to vector<32x128xf32>
    %29 = arith.maximumf %22, %28 : vector<32x128xf32>
    %c2_i32 = arith.constant 2 : i32
    %30 = vector.broadcast %c2_i32 : i32 to vector<32x128xi32>
    %31 = arith.cmpi eq, %11, %30 : vector<32x128xi32>
    %32 = arith.select %31, %28, %25 : vector<32x128xi1>, vector<32x128xf32>
    %c0_14 = arith.constant 0 : index
    %c3 = arith.constant 3 : index
    %33 = arith.index_cast %8 : i32 to index
    %c0_15 = arith.constant 0 : index
    %34 = vector.load %arg3[%c0_14, %c3, %33, %c0_15] : memref<1x4x32x128xf32, #tpu.memory_space<vmem>>, vector<1x1x32x128xf32>
    %35 = vector.shape_cast %34 : vector<1x1x32x128xf32> to vector<32x128xf32>
    %36 = arith.maximumf %29, %35 : vector<32x128xf32>
    %c3_i32 = arith.constant 3 : i32
    %37 = vector.broadcast %c3_i32 : i32 to vector<32x128xi32>
    %38 = arith.cmpi eq, %11, %37 : vector<32x128xi32>
    %39 = arith.select %38, %35, %32 : vector<32x128xi1>, vector<32x128xf32>
    %cst_16 = arith.constant 0.000000e+00 : f32
    %40 = vector.broadcast %cst_16 : f32 to vector<32x128xf32>
    %c0_17 = arith.constant 0 : index
    %c0_18 = arith.constant 0 : index
    %41 = arith.index_cast %8 : i32 to index
    %c0_19 = arith.constant 0 : index
    %42 = vector.load %arg3[%c0_17, %c0_18, %41, %c0_19] : memref<1x4x32x128xf32, #tpu.memory_space<vmem>>, vector<1x1x32x128xf32>
    %43 = vector.shape_cast %42 : vector<1x1x32x128xf32> to vector<32x128xf32>
    %44 = arith.subf %43, %36 : vector<32x128xf32>
    %45 = math.exp %44 : vector<32x128xf32>
    %46 = arith.addf %40, %45 : vector<32x128xf32>
    %c0_20 = arith.constant 0 : index
    %c1_21 = arith.constant 1 : index
    %47 = arith.index_cast %8 : i32 to index
    %c0_22 = arith.constant 0 : index
    %48 = vector.load %arg3[%c0_20, %c1_21, %47, %c0_22] : memref<1x4x32x128xf32, #tpu.memory_space<vmem>>, vector<1x1x32x128xf32>
    %49 = vector.shape_cast %48 : vector<1x1x32x128xf32> to vector<32x128xf32>
    %50 = arith.subf %49, %36 : vector<32x128xf32>
    %51 = math.exp %50 : vector<32x128xf32>
    %52 = arith.addf %46, %51 : vector<32x128xf32>
    %c0_23 = arith.constant 0 : index
    %c2_24 = arith.constant 2 : index
    %53 = arith.index_cast %8 : i32 to index
    %c0_25 = arith.constant 0 : index
    %54 = vector.load %arg3[%c0_23, %c2_24, %53, %c0_25] : memref<1x4x32x128xf32, #tpu.memory_space<vmem>>, vector<1x1x32x128xf32>
    %55 = vector.shape_cast %54 : vector<1x1x32x128xf32> to vector<32x128xf32>
    %56 = arith.subf %55, %36 : vector<32x128xf32>
    %57 = math.exp %56 : vector<32x128xf32>
    %58 = arith.addf %52, %57 : vector<32x128xf32>
    %c0_26 = arith.constant 0 : index
    %c3_27 = arith.constant 3 : index
    %59 = arith.index_cast %8 : i32 to index
    %c0_28 = arith.constant 0 : index
    %60 = vector.load %arg3[%c0_26, %c3_27, %59, %c0_28] : memref<1x4x32x128xf32, #tpu.memory_space<vmem>>, vector<1x1x32x128xf32>
    %61 = vector.shape_cast %60 : vector<1x1x32x128xf32> to vector<32x128xf32>
    %62 = arith.subf %61, %36 : vector<32x128xf32>
    %63 = math.exp %62 : vector<32x128xf32>
    %64 = arith.addf %58, %63 : vector<32x128xf32>
    %65 = arith.addi %5, %8 : i32
    %66 = tpu.iota {dimensions = array<i32: 0>} : vector<32x128xi32>
    %67 = vector.broadcast %65 : i32 to vector<32x128xi32>
    %68 = arith.addi %67, %66 : vector<32x128xi32>
    %c255_i32 = arith.constant 255 : i32
    %69 = vector.broadcast %c255_i32 : i32 to vector<32x128xi32>
    %70 = arith.cmpi ne, %11, %69 : vector<32x128xi32>
    %c32_i32_29 = arith.constant 32 : i32
    %71 = vector.broadcast %c32_i32_29 : i32 to vector<32x128xi32>
    %72 = arith.cmpi slt, %68, %71 : vector<32x128xi32>
    %73 = arith.andi %70, %72 : vector<32x128xi1>
    %74 = math.log %64 : vector<32x128xf32>
    %75 = arith.addf %36, %74 : vector<32x128xf32>
    %76 = arith.subf %75, %39 : vector<32x128xf32>
    %cst_30 = arith.constant 0.000000e+00 : f32
    %77 = vector.broadcast %cst_30 : f32 to vector<32x128xf32>
    %78 = arith.select %73, %76, %77 : vector<32x128xi1>, vector<32x128xf32>
    %79 = arith.extui %73 : vector<32x128xi1> to vector<32x128xi32>
    %80 = arith.sitofp %79 : vector<32x128xi32> to vector<32x128xf32>
    %81 = vector.extract_strided_slice %78 {offsets = [0, 0], sizes = [8, 128], strides = [1, 1]} : vector<32x128xf32> to vector<8x128xf32>
    %82 = arith.addf %6, %81 : vector<8x128xf32>
    %83 = vector.extract_strided_slice %80 {offsets = [0, 0], sizes = [8, 128], strides = [1, 1]} : vector<32x128xf32> to vector<8x128xf32>
    %84 = arith.addf %6, %83 : vector<8x128xf32>
    %85 = vector.extract_strided_slice %78 {offsets = [8, 0], sizes = [8, 128], strides = [1, 1]} : vector<32x128xf32> to vector<8x128xf32>
    %86 = arith.addf %82, %85 : vector<8x128xf32>
    %87 = vector.extract_strided_slice %80 {offsets = [8, 0], sizes = [8, 128], strides = [1, 1]} : vector<32x128xf32> to vector<8x128xf32>
    %88 = arith.addf %84, %87 : vector<8x128xf32>
    %89 = vector.extract_strided_slice %78 {offsets = [16, 0], sizes = [8, 128], strides = [1, 1]} : vector<32x128xf32> to vector<8x128xf32>
    %90 = arith.addf %86, %89 : vector<8x128xf32>
    %91 = vector.extract_strided_slice %80 {offsets = [16, 0], sizes = [8, 128], strides = [1, 1]} : vector<32x128xf32> to vector<8x128xf32>
    %92 = arith.addf %88, %91 : vector<8x128xf32>
    %93 = vector.extract_strided_slice %78 {offsets = [24, 0], sizes = [8, 128], strides = [1, 1]} : vector<32x128xf32> to vector<8x128xf32>
    %94 = arith.addf %90, %93 : vector<8x128xf32>
    %95 = vector.extract_strided_slice %80 {offsets = [24, 0], sizes = [8, 128], strides = [1, 1]} : vector<32x128xf32> to vector<8x128xf32>
    %96 = arith.addf %92, %95 : vector<8x128xf32>
    %c1_i32_31 = arith.constant 1 : i32
    %c0_32 = arith.constant 0 : index
    %c0_33 = arith.constant 0 : index
    %c0_34 = arith.constant 0 : index
    %c0_35 = arith.constant 0 : index
    %97 = vector.load %arg5[%c0_32, %c0_33, %c0_34, %c0_35] : memref<1x1x8x128xf32, #tpu.memory_space<vmem>>, vector<1x1x8x128xf32>
    %98 = vector.shape_cast %97 : vector<1x1x8x128xf32> to vector<8x128xf32>
    %99 = arith.addf %98, %94 : vector<8x128xf32>
    %c0_36 = arith.constant 0 : index
    %c0_37 = arith.constant 0 : index
    %c0_38 = arith.constant 0 : index
    %c0_39 = arith.constant 0 : index
    %100 = vector.load %arg5[%c0_36, %c0_37, %c0_38, %c0_39] : memref<1x1x8x128xf32, #tpu.memory_space<vmem>>, vector<1x1x8x128xf32>
    %101 = vector.shape_cast %100 : vector<1x1x8x128xf32> to vector<8x128xf32>
    %102 = vector.shape_cast %99 : vector<8x128xf32> to vector<1x1x8x128xf32>
    tpu.vector_store %arg5[%c0_36, %c0_37, %c0_38, %c0_39], %102 {strides = array<i32>} : memref<1x1x8x128xf32, #tpu.memory_space<vmem>>, vector<1x1x8x128xf32>,
    %c0_40 = arith.constant 0 : index
    %c0_41 = arith.constant 0 : index
    %c0_42 = arith.constant 0 : index
    %c0_43 = arith.constant 0 : index
    %103 = vector.load %arg6[%c0_40, %c0_41, %c0_42, %c0_43] : memref<1x1x8x128xf32, #tpu.memory_space<vmem>>, vector<1x1x8x128xf32>
    %104 = vector.shape_cast %103 : vector<1x1x8x128xf32> to vector<8x128xf32>
    %105 = arith.addf %104, %96 : vector<8x128xf32>
    %c0_44 = arith.constant 0 : index
    %c0_45 = arith.constant 0 : index
    %c0_46 = arith.constant 0 : index
    %c0_47 = arith.constant 0 : index
    %106 = vector.load %arg6[%c0_44, %c0_45, %c0_46, %c0_47] : memref<1x1x8x128xf32, #tpu.memory_space<vmem>>, vector<1x1x8x128xf32>
    %107 = vector.shape_cast %106 : vector<1x1x8x128xf32> to vector<8x128xf32>
    %108 = vector.shape_cast %105 : vector<8x128xf32> to vector<1x1x8x128xf32>
    tpu.vector_store %arg6[%c0_44, %c0_45, %c0_46, %c0_47], %108 {strides = array<i32>} : memref<1x1x8x128xf32, #tpu.memory_space<vmem>>, vector<1x1x8x128xf32>,
    return
  }
  func.func @transform_0(%arg0: i32, %arg1: i32, %arg2: i32) -> (i32, i32, i32, i32) {
    %c1_i32 = arith.constant 1 : i32
    %0 = arith.muli %arg1, %c1_i32 : i32
    %1 = arith.addi %0, %arg2 : i32
    %c0_i32 = arith.constant 0 : i32
    %2 = arith.minsi %1, %c0_i32 : i32
    %c0_i32_0 = arith.constant 0 : i32
    %c0_i32_1 = arith.constant 0 : i32
    %c0_i32_2 = arith.constant 0 : i32
    return %arg0, %c0_i32_0, %2, %c0_i32_1 : i32, i32, i32, i32
  }
  func.func @transform_1(%arg0: i32, %arg1: i32, %arg2: i32) -> (i32, i32, i32) {
    %c1_i32 = arith.constant 1 : i32
    %0 = arith.muli %arg1, %c1_i32 : i32
    %1 = arith.addi %0, %arg2 : i32
    %c0_i32 = arith.constant 0 : i32
    %2 = arith.minsi %1, %c0_i32 : i32
    %c0_i32_0 = arith.constant 0 : i32
    %c0_i32_1 = arith.constant 0 : i32
    return %arg0, %2, %c0_i32_0 : i32, i32, i32
  }
  func.func @transform_2(%arg0: i32, %arg1: i32, %arg2: i32) -> (i32, i32, i32, i32) {
    %c0_i32 = arith.constant 0 : i32
    %c0_i32_0 = arith.constant 0 : i32
    %c0_i32_1 = arith.constant 0 : i32
    return %arg0, %arg1, %c0_i32, %c0_i32_0 : i32, i32, i32, i32
  }
  func.func @transform_3(%arg0: i32, %arg1: i32, %arg2: i32) -> (i32, i32, i32, i32) {
    %c0_i32 = arith.constant 0 : i32
    %c0_i32_0 = arith.constant 0 : i32
    %c0_i32_1 = arith.constant 0 : i32
    return %arg0, %arg1, %c0_i32, %c0_i32_0 : i32, i32, i32, i32
  }
}

</mosaic_0001>

<llo_original>
// kernel: cross_entropy_loss_2d.1
$region0: #{cross_entropy_loss_2d.1}
  #allocation0 [shape = 'u32[]', space=smem, size = 0x4, offset = 0x4, fixed_abs, tag = 'smem constant byte address 0x4 - core index']
  #allocation1 [shape = 'u32[144,128]{1,0:T(1,128)}', space=vmem, size = 0x12000, scoped, tag = 'internal scratch']
  %s0 = inlined_call_operand.vmem [shape: f32[2,4,32,128], index: 0, kind: input, shape index: {}]
  %s1 = inlined_call_operand.vmem [shape: s32[2,32,128], index: 1, kind: input, shape index: {}]
  %s2 = inlined_call_operand.vmem [shape: f32[2,1,8,128], index: 2, kind: output, shape index: {0}]
  %s3 = inlined_call_operand.vmem [shape: f32[2,1,8,128], index: 3, kind: output, shape index: {1}]
  %4 = xla_tuple %s2, %s3
  %s5 = sld [smem:[#allocation0]]
  $region53: #{cross_entropy_loss_2d.1} parent=0
    _
  %s7 = ssub.s32 1, %s5
  %s8 = scalar_select 0, %s7, %s5
  loop: start=0, step=1, limit=4
  $region2: #{cross_entropy_loss_2d.1} parent=0 // loop_pre_header
    _
  $region3: #{cross_entropy_loss_2d.1} parent=0 // loop_header
    %s10 = sphi 0, %s14
    %p11 = scmp.ge.s32.totalorder %s10, 4
    %s17 = sphi 0, %s36
    %s18 = sphi 0, %s32
    %s19 = sphi 0, %s28
    %s20 = sphi 0, %s17
    %s21 = sphi 0, %s18
    %s22 = sphi 0, %s19
    %s23 = sphi 0, %s20
    %s24 = sphi 0, %s21
    %s25 = sphi 0, %s22
    %s47 = sphi 0, %s49
    %s50 = sphi 0, %s47
    %s51 = sphi 0, %s50
    %s67 = sphi 0, %s51
    %s81 = sphi 0, %s83
    %s84 = sphi 0, %s81
    %s85 = sphi 0, %s84
    %s101 = sphi 0, %s85
    %s109 = sphi 0, %s111
    %s112 = sphi 0, %s109
    %s113 = sphi 0, %s112
    %s129 = sphi 0, %s113
    %s137 = sphi 0, %s139
    %s140 = sphi 0, %s137
    %s141 = sphi 0, %s140
    %s157 = sphi 0, %s141
  $region4: #{cross_entropy_loss_2d.1} parent=0 // loop_header_branch
    %13 = sbr.rel (%p11) target = $region8
  $region5: #{cross_entropy_loss_2d.1} parent=0 // loop_body
    %s15 = ssub.s32 %s10, 1
    %s16 = ssub.s32 %s10, 2
    %s26 = sadd.s32 1, %s19
    %p27 = scmp.ge.s32.totalorder %s26, 1
    %s28 = scalar_select %p27, 0, %s26
    %s29 = sadd.s32 1, %s18
    %s30 = scalar_select %p27, %s29, %s18
    %p31 = scmp.ge.s32.totalorder %s30, 1
    %s32 = scalar_select %p31, 0, %s30
    %s33 = sadd.s32 1, %s17
    %s34 = scalar_select %p31, %s33, %s17
    %p35 = scmp.ge.s32.totalorder %s34, 2
    %s36 = scalar_select %p35, 0, %s34
    %s37 = sadd.s32 %s18, %s19
    %p38 = scmp.lt.s32.totalorder %s37, 0
    %s39 = scalar_select %p38, %s37, 0
    %s40 = sadd.s32 %s32, %s28
    %p41 = scmp.lt.s32.totalorder %s40, 0
    %s42 = scalar_select %p41, %s40, 0
    %s43 = ssub.s32 %s17, %s36
    %s44 = ssub.s32 %s39, %s42
    %s45 = sor.u32 %s43, %s44
    %p46 = scmp.eq.s32.totalorder %s45, 0
    %s48 = sadd.s32 %s47, 1
    %s49 = scalar_select %p46, %s47, %s48
    %p52 = pneg %p46
    %p53 = scmp.eq.s32.totalorder %s10, 1
    %p54 = por %p52, %p53
    %p55 = scmp.ne.s32.totalorder %s47, %s50
    %p56 = scmp.eq.s32.totalorder %s10, 0
    %p57 = por %p55, %p56
    %p58 = scmp.ne.s32.totalorder %s47, %s50
    %p59 = scmp.eq.s32.totalorder %s15, 1
    %p60 = por %p58, %p59
    %p61 = scmp.ne.s32.totalorder %s50, %s51
    %p62 = scmp.eq.s32.totalorder %s15, 0
    %p63 = por %p61, %p62
    %p64 = scmp.ne.s32.totalorder %s50, %s51
    %p65 = scmp.eq.s32.totalorder %s16, 1
    %p66 = por %p64, %p65
    %p68 = scmp.ne.s32.totalorder %s51, %s67
    %p69 = scmp.eq.s32.totalorder %s16, 0
    %p70 = por %p68, %p69
    %s71 = sadd.s32 %s18, %s19
    %p72 = scmp.lt.s32.totalorder %s71, 0
    %s73 = scalar_select %p72, %s71, 0
    %s74 = sadd.s32 %s32, %s28
    %p75 = scmp.lt.s32.totalorder %s74, 0
    %s76 = scalar_select %p75, %s74, 0
    %s77 = ssub.s32 %s17, %s36
    %s78 = ssub.s32 %s73, %s76
    %s79 = sor.u32 %s77, %s78
    %p80 = scmp.eq.s32.totalorder %s79, 0
    %s82 = sadd.s32 %s81, 1
    %s83 = scalar_select %p80, %s81, %s82
    %p86 = pneg %p80
    %p87 = scmp.eq.s32.totalorder %s10, 1
    %p88 = por %p86, %p87
    %p89 = scmp.ne.s32.totalorder %s81, %s84
    %p90 = scmp.eq.s32.totalorder %s10, 0
    %p91 = por %p89, %p90
    %p92 = scmp.ne.s32.totalorder %s81, %s84
    %p93 = scmp.eq.s32.totalorder %s15, 1
    %p94 = por %p92, %p93
    %p95 = scmp.ne.s32.totalorder %s84, %s85
    %p96 = scmp.eq.s32.totalorder %s15, 0
    %p97 = por %p95, %p96
    %p98 = scmp.ne.s32.totalorder %s84, %s85
    %p99 = scmp.eq.s32.totalorder %s16, 1
    %p100 = por %p98, %p99
    %p102 = scmp.ne.s32.totalorder %s85, %s101
    %p103 = scmp.eq.s32.totalorder %s16, 0
    %p104 = por %p102, %p103
    %s105 = ssub.s32 %s17, %s36
    %s106 = ssub.s32 %s18, %s32
    %s107 = sor.u32 %s105, %s106
    %p108 = scmp.eq.s32.totalorder %s107, 0
    %s110 = sadd.s32 %s109, 1
    %s111 = scalar_select %p108, %s109, %s110
    %p114 = pneg %p108
    %p115 = scmp.eq.s32.totalorder %s10, 1
    %p116 = por %p114, %p115
    %p117 = scmp.ne.s32.totalorder %s109, %s112
    %p118 = scmp.eq.s32.totalorder %s10, 0
    %p119 = por %p117, %p118
    %p120 = scmp.ne.s32.totalorder %s109, %s112
    %p121 = scmp.eq.s32.totalorder %s15, 1
    %p122 = por %p120, %p121
    %p123 = scmp.ne.s32.totalorder %s112, %s113
    %p124 = scmp.eq.s32.totalorder %s15, 0
    %p125 = por %p123, %p124
    %p126 = scmp.ne.s32.totalorder %s112, %s113
    %p127 = scmp.eq.s32.totalorder %s16, 1
    %p128 = por %p126, %p127
    %p130 = scmp.ne.s32.totalorder %s113, %s129
    %p131 = scmp.eq.s32.totalorder %s16, 0
    %p132 = por %p130, %p131
    %s133 = ssub.s32 %s17, %s36
    %s134 = ssub.s32 %s18, %s32
    %s135 = sor.u32 %s133, %s134
    %p136 = scmp.eq.s32.totalorder %s135, 0
    %s138 = sadd.s32 %s137, 1
    %s139 = scalar_select %p136, %s137, %s138
    %p142 = pneg %p136
    %p143 = scmp.eq.s32.totalorder %s10, 1
    %p144 = por %p142, %p143
    %p145 = scmp.ne.s32.totalorder %s137, %s140
    %p146 = scmp.eq.s32.totalorder %s10, 0
    %p147 = por %p145, %p146
    %p148 = scmp.ne.s32.totalorder %s137, %s140
    %p149 = scmp.eq.s32.totalorder %s15, 1
    %p150 = por %p148, %p149
    %p151 = scmp.ne.s32.totalorder %s140, %s141
    %p152 = scmp.eq.s32.totalorder %s15, 0
    %p153 = por %p151, %p152
    %p154 = scmp.ne.s32.totalorder %s140, %s141
    %p155 = scmp.eq.s32.totalorder %s16, 1
    %p156 = por %p154, %p155
    %p158 = scmp.ne.s32.totalorder %s141, %s157
    %p159 = scmp.eq.s32.totalorder %s16, 0
    %p160 = por %p158, %p159
    %p161 = scmp.le.s32.totalorder 1, %s10
    %p162 = scmp.lt.s32.totalorder %s10, 3
    %p163 = pnand %p161, %p162
    %p164 = pneg %p163
    // Predicated region
    $region9: #{cross_entropy_loss_2d.1} parent=5 // pred_check
      _
    $region10: #{cross_entropy_loss_2d.1} parent=5 // pred_check_branch
      %166 = sbr.rel (%p163) target = $region12
    $region11: #{cross_entropy_loss_2d.1} parent=5 // pred_region
      %s167 = ssub.s32 %s10, 1
    $region12: #{cross_entropy_loss_2d.1} parent=5 // pred_fallthru
      _
    %p168 = scmp.lt.s32.totalorder %s10, 2
    // Predicated region
    $region13: #{cross_entropy_loss_2d.1} parent=5 // pred_check
      %p169 = pneg %p168
    $region14: #{cross_entropy_loss_2d.1} parent=5 // pred_check_branch
      %171 = sbr.rel (%p169) target = $region16
    $region15: #{cross_entropy_loss_2d.1} parent=5 // pred_region
      // Predicated region
      $region17: #{cross_entropy_loss_2d.1} parent=15 // pred_check
        %p172 = pneg %p57
      $region18: #{cross_entropy_loss_2d.1} parent=15 // pred_check_branch
        %174 = sbr.rel (%p172) target = $region20
      $region19: #{cross_entropy_loss_2d.1} parent=15 // pred_region
        %s175 = sadd.s32 %s18, %s19
        %p176 = scmp.lt.s32.totalorder %s175, 0
        %s177 = scalar_select %p176, %s175, 0
        %s178 = smul.u32 4, %s177
        %p179 = scmp.lt.s32.totalorder %s17, 1
        %s180 = scalar_select %p179, %s17, 1
        %p181 = scmp.lt.s32.totalorder %s178, 3
        %s182 = scalar_select %p181, %s178, 3
        %s183 = smul.addr %s180, 16
        %s184 = sadd.s32 %s182, %s183
        %s185 = smul.addr %s184, 8
        %s186 = scalar_lea.vmem %s0, %s185
        %s187 = sadd.s32 %s18, %s19
        %p188 = scmp.lt.s32.totalorder %s187, 0
        %s189 = scalar_select %p188, %s187, 0
        %s190 = smul.u32 4, %s189
      $region20: #{cross_entropy_loss_2d.1} parent=15 // pred_fallthru
        _
      // Predicated region
      $region21: #{cross_entropy_loss_2d.1} parent=15 // pred_check
        %p191 = pneg %p91
      $region22: #{cross_entropy_loss_2d.1} parent=15 // pred_check_branch
        %193 = sbr.rel (%p191) target = $region24
      $region23: #{cross_entropy_loss_2d.1} parent=15 // pred_region
        %s194 = sadd.s32 %s18, %s19
        %p195 = scmp.lt.s32.totalorder %s194, 0
        %s196 = scalar_select %p195, %s194, 0
        %s197 = smul.u32 4, %s196
        %p198 = scmp.lt.s32.totalorder %s17, 1
        %s199 = scalar_select %p198, %s17, 1
        %p200 = scmp.lt.s32.totalorder %s197, 3
        %s201 = scalar_select %p200, %s197, 3
        %s202 = smul.addr %s199, 4
        %s203 = sadd.s32 %s201, %s202
        %s204 = smul.addr %s203, 8
        %s205 = scalar_lea.vmem %s1, %s204
        %s206 = sadd.s32 %s18, %s19
        %p207 = scmp.lt.s32.totalorder %s206, 0
        %s208 = scalar_select %p207, %s206, 0
        %s209 = smul.u32 4, %s208
      $region24: #{cross_entropy_loss_2d.1} parent=15 // pred_fallthru
        _
    $region16: #{cross_entropy_loss_2d.1} parent=5 // pred_fallthru
      _
    %p210 = scmp.le.s32.totalorder 1, %s10
    %p211 = scmp.lt.s32.totalorder %s10, 3
    %p212 = pnand %p210, %p211
    %p213 = pneg %p212
    // Predicated region
    $region25: #{cross_entropy_loss_2d.1} parent=5 // pred_check
      _
    $region26: #{cross_entropy_loss_2d.1} parent=5 // pred_check_branch
      %215 = sbr.rel (%p212) target = $region28
    $region27: #{cross_entropy_loss_2d.1} parent=5 // pred_region
      %s216 = ssub.s32 %s10, 1
      %s217 = sadd.s32 %s21, %s22
      %p218 = scmp.lt.s32.totalorder %s217, 0
      %s219 = scalar_select %p218, %s217, 0
      %s220 = smul.u32 4, %s219
      %p221 = scmp.lt.s32.totalorder %s20, 1
      %s222 = scalar_select %p221, %s20, 1
      %p223 = scmp.lt.s32.totalorder %s220, 3
      %s224 = scalar_select %p223, %s220, 3
      %s225 = smul.addr %s222, 16
      %s226 = sadd.s32 %s224, %s225
      %s227 = smul.addr %s226, 8
      %s228 = scalar_lea.vmem %s0, %s227
      %p229 = pneg %p63
      %p230 = pneg %p60
      %s231 = sadd.s32 %s21, %s22
      %p232 = scmp.lt.s32.totalorder %s231, 0
      %s233 = scalar_select %p232, %s231, 0
      %s234 = smul.u32 4, %s233
      %p235 = scmp.lt.s32.totalorder %s20, 1
      %s236 = scalar_select %p235, %s20, 1
      %p237 = scmp.lt.s32.totalorder %s234, 3
      %s238 = scalar_select %p237, %s234, 3
      %s239 = smul.addr %s236, 4
      %s240 = sadd.s32 %s238, %s239
      %s241 = smul.addr %s240, 8
      %s242 = scalar_lea.vmem %s1, %s241
      %p243 = pneg %p97
      %p244 = pneg %p94
      %p245 = pneg %p125
      %p246 = pneg %p122
      %p247 = scmp.lt.s32.totalorder %s20, 1
      %s248 = scalar_select %p247, %s20, 1
      %p249 = scmp.lt.s32.totalorder %s21, 0
      %s250 = scalar_select %p249, %s21, 0
      %s251 = sadd.s32 %s250, %s248
      %s252 = smul.addr %s251, 8
      %s253 = scalar_lea.vmem %s2, %s252
      %p254 = pneg %p153
      %p255 = pneg %p150
      %p256 = scmp.lt.s32.totalorder %s20, 1
      %s257 = scalar_select %p256, %s20, 1
      %p258 = scmp.lt.s32.totalorder %s21, 0
      %s259 = scalar_select %p258, %s21, 0
      %s260 = sadd.s32 %s259, %s257
      %s261 = smul.addr %s260, 8
      %s262 = scalar_lea.vmem %s3, %s261
      %s263 = sadd.s32 %s21, %s22
      %p264 = scmp.lt.s32.totalorder %s263, 0
      %s265 = scalar_select %p264, %s263, 0
      %s266 = smul.u32 4, %s265
      %p267 = scmp.lt.s32.totalorder %s20, 1
      %s268 = scalar_select %p267, %s20, 1
      %p269 = scmp.lt.s32.totalorder %s266, 3
      %s270 = scalar_select %p269, %s266, 3
      %s271 = smul.addr %s268, 16
      %s272 = sadd.s32 %s270, %s271
      %s273 = smul.addr %s272, 8
      %s274 = scalar_lea.vmem %s0, %s273
      %s275 = sadd.s32 %s21, %s22
      %p276 = scmp.lt.s32.totalorder %s275, 0
      %s277 = scalar_select %p276, %s275, 0
      %s278 = smul.u32 4, %s277
      %s279 = sadd.s32 %s21, %s22
      %p280 = scmp.lt.s32.totalorder %s279, 0
      %s281 = scalar_select %p280, %s279, 0
      %s282 = smul.u32 4, %s281
      %p283 = scmp.lt.s32.totalorder %s20, 1
      %s284 = scalar_select %p283, %s20, 1
      %p285 = scmp.lt.s32.totalorder %s282, 3
      %s286 = scalar_select %p285, %s282, 3
      %s287 = smul.addr %s284, 4
      %s288 = sadd.s32 %s286, %s287
      %s289 = smul.addr %s288, 8
      %s290 = scalar_lea.vmem %s1, %s289
      %s291 = sadd.s32 %s21, %s22
      %p292 = scmp.lt.s32.totalorder %s291, 0
      %s293 = scalar_select %p292, %s291, 0
      %s294 = smul.u32 4, %s293
      %p295 = scmp.lt.s32.totalorder %s20, 1
      %s296 = scalar_select %p295, %s20, 1
      %p297 = scmp.lt.s32.totalorder %s21, 0
      %s298 = scalar_select %p297, %s21, 0
      %s299 = sadd.s32 %s298, %s296
      %s300 = smul.addr %s299, 8
      %s301 = scalar_lea.vmem %s2, %s300
      %p302 = scmp.lt.s32.totalorder %s20, 1
      %s303 = scalar_select %p302, %s20, 1
      %p304 = scmp.lt.s32.totalorder %s21, 0
      %s305 = scalar_select %p304, %s21, 0
      %s306 = sadd.s32 %s305, %s303
      %s307 = smul.addr %s306, 8
      %s308 = scalar_lea.vmem %s3, %s307
      %p309 = scmp.eq.s32.totalorder %s22, 0
      // Predicated region
      $region29: #{cross_entropy_loss_2d.1} parent=27 // pred_check
        %p310 = pneg %p309
      $region30: #{cross_entropy_loss_2d.1} parent=27 // pred_check_branch
        %312 = sbr.rel (%p310) target = $region32
      $region31: #{cross_entropy_loss_2d.1} parent=27 // pred_region
        %313 = vst [vmem:[%s301] sm:$0xff] 0.0
        %314 = vst [vmem:[%s308] sm:$0xff] 0.0
      $region32: #{cross_entropy_loss_2d.1} parent=27 // pred_fallthru
        _
      %s315 = sadd.s32 %s21, %s22
      %s316 = smul.u32 %s315, 32
      %v317 = vld [vmem:[%s290] sm:$0xff]
      %v318 = vld [vmem:[%s290 + $0x8] sm:$0xff]
      %v319 = vld [vmem:[%s290 + $0x10] sm:$0xff]
      %v320 = vld [vmem:[%s290 + $0x18] sm:$0xff]
      %v321 = vld [vmem:[%s274] sm:$0xff]
      %v322 = vld [vmem:[%s274 + $0x8] sm:$0xff]
      %v323 = vld [vmem:[%s274 + $0x10] sm:$0xff]
      %v324 = vld [vmem:[%s274 + $0x18] sm:$0xff]
      %vm325 = vcmp.eq.s32.totalorder %v317, 0
      %vm326 = vcmp.eq.s32.totalorder %v318, 0
      %vm327 = vcmp.eq.s32.totalorder %v319, 0
      %vm328 = vcmp.eq.s32.totalorder %v320, 0
      %v329 = vsel %vm325, %v321, 0.0
      %v330 = vsel %vm326, %v322, 0.0
      %v331 = vsel %vm327, %v323, 0.0
      %v332 = vsel %vm328, %v324, 0.0
      %s333 = sadd.s32 0, 32
      %s334 = scalar_lea.vmem %s274, %s333
      %v335 = vld [vmem:[%s334] sm:$0xff]
      %v336 = vld [vmem:[%s334 + $0x8] sm:$0xff]
      %v337 = vld [vmem:[%s334 + $0x10] sm:$0xff]
      %v338 = vld [vmem:[%s334 + $0x18] sm:$0xff]
      %v339 = vmax.f32 %v321, %v335
      %v340 = vmax.f32 %v322, %v336
      %v341 = vmax.f32 %v323, %v337
      %v342 = vmax.f32 %v324, %v338
      %vm343 = vcmp.eq.s32.totalorder %v317, 1
      %vm344 = vcmp.eq.s32.totalorder %v318, 1
      %vm345 = vcmp.eq.s32.totalorder %v319, 1
      %vm346 = vcmp.eq.s32.totalorder %v320, 1
      %v347 = vsel %vm343, %v335, %v329
      %v348 = vsel %vm344, %v336, %v330
      %v349 = vsel %vm345, %v337, %v331
      %v350 = vsel %vm346, %v338, %v332
      %s351 = sadd.s32 0, 64
      %s352 = scalar_lea.vmem %s274, %s351
      %v353 = vld [vmem:[%s352] sm:$0xff]
      %v354 = vld [vmem:[%s352 + $0x8] sm:$0xff]
      %v355 = vld [vmem:[%s352 + $0x10] sm:$0xff]
      %v356 = vld [vmem:[%s352 + $0x18] sm:$0xff]
      %v357 = vmax.f32 %v339, %v353
      %v358 = vmax.f32 %v340, %v354
      %v359 = vmax.f32 %v341, %v355
      %v360 = vmax.f32 %v342, %v356
      %vm361 = vcmp.eq.s32.totalorder %v317, 2
      %vm362 = vcmp.eq.s32.totalorder %v318, 2
      %vm363 = vcmp.eq.s32.totalorder %v319, 2
      %vm364 = vcmp.eq.s32.totalorder %v320, 2
      %v365 = vsel %vm361, %v353, %v347
      %v366 = vsel %vm362, %v354, %v348
      %v367 = vsel %vm363, %v355, %v349
      %v368 = vsel %vm364, %v356, %v350
      %s369 = sadd.s32 0, 96
      %s370 = scalar_lea.vmem %s274, %s369
      %v371 = vld [vmem:[%s370] sm:$0xff]
      %v372 = vld [vmem:[%s370 + $0x8] sm:$0xff]
      %v373 = vld [vmem:[%s370 + $0x10] sm:$0xff]
      %v374 = vld [vmem:[%s370 + $0x18] sm:$0xff]
      %v375 = vmax.f32 %v357, %v371
      %v376 = vmax.f32 %v358, %v372
      %v377 = vmax.f32 %v359, %v373
      %v378 = vmax.f32 %v360, %v374
      %vm379 = vcmp.eq.s32.totalorder %v317, 3
      %vm380 = vcmp.eq.s32.totalorder %v318, 3
      %vm381 = vcmp.eq.s32.totalorder %v319, 3
      %vm382 = vcmp.eq.s32.totalorder %v320, 3
      %v383 = vsel %vm379, %v371, %v365
      %v384 = vsel %vm380, %v372, %v366
      %v385 = vsel %vm381, %v373, %v367
      %v386 = vsel %vm382, %v374, %v368
      %v387 = vsub.f32 %v321, %v375
      %v388 = vsub.f32 %v322, %v376
      %v389 = vsub.f32 %v323, %v377
      %v390 = vsub.f32 %v324, %v378
      %v391 = vmul.f32 %v387, 1.442695
      %v392 = vpow.pop %v391
      %v393 = vmul.f32 %v388, 1.442695
      %v394 = vpow.pop %v393
      %v395 = vmul.f32 %v389, 1.442695
      %v396 = vpow.pop %v395
      %v397 = vmul.f32 %v390, 1.442695
      %v398 = vpow.pop %v397
      %v399 = vadd.f32 %v392, 0.0
      %v400 = vadd.f32 %v394, 0.0
      %v401 = vadd.f32 %v396, 0.0
      %v402 = vadd.f32 %v398, 0.0
      %v403 = vsub.f32 %v335, %v375
      %v404 = vsub.f32 %v336, %v376
      %v405 = vsub.f32 %v337, %v377
      %v406 = vsub.f32 %v338, %v378
      %v407 = vmul.f32 %v403, 1.442695
      %v408 = vpow.pop %v407
      %v409 = vmul.f32 %v404, 1.442695
      %v410 = vpow.pop %v409
      %v411 = vmul.f32 %v405, 1.442695
      %v412 = vpow.pop %v411
      %v413 = vmul.f32 %v406, 1.442695
      %v414 = vpow.pop %v413
      %v415 = vadd.f32 %v399, %v408
      %v416 = vadd.f32 %v400, %v410
      %v417 = vadd.f32 %v401, %v412
      %v418 = vadd.f32 %v402, %v414
      %v419 = vsub.f32 %v353, %v375
      %v420 = vsub.f32 %v354, %v376
      %v421 = vsub.f32 %v355, %v377
      %v422 = vsub.f32 %v356, %v378
      %v423 = vmul.f32 %v419, 1.442695
      %v424 = vpow.pop %v423
      %v425 = vmul.f32 %v420, 1.442695
      %v426 = vpow.pop %v425
      %v427 = vmul.f32 %v421, 1.442695
      %v428 = vpow.pop %v427
      %v429 = vmul.f32 %v422, 1.442695
      %v430 = vpow.pop %v429
      %v431 = vadd.f32 %v415, %v424
      %v432 = vadd.f32 %v416, %v426
      %v433 = vadd.f32 %v417, %v428
      %v434 = vadd.f32 %v418, %v430
      %v435 = vsub.f32 %v371, %v375
      %v436 = vsub.f32 %v372, %v376
      %v437 = vsub.f32 %v373, %v377
      %v438 = vsub.f32 %v374, %v378
      %v439 = vmul.f32 %v435, 1.442695
      %v440 = vpow.pop %v439
      %v441 = vmul.f32 %v436, 1.442695
      %v442 = vpow.pop %v441
      %v443 = vmul.f32 %v437, 1.442695
      %v444 = vpow.pop %v443
      %v445 = vmul.f32 %v438, 1.442695
      %v446 = vpow.pop %v445
      %v447 = vadd.f32 %v431, %v440
      %v448 = vadd.f32 %v432, %v442
      %v449 = vadd.f32 %v433, %v444
      %v450 = vadd.f32 %v434, %v446
      %s451 = sadd.s32 %s316, 0
      %v452 = vlaneseq
      %v453 = vshrl.u32 %v452, 7
      %v454 = vadd.s32 %v453, 8
      %v455 = vadd.s32 %v453, 16
      %v456 = vadd.s32 %v453, 24
      %v457 = vstv %s451
      %v458 = vadd.s32 %v457, %v453
      %v459 = vadd.s32 %v457, %v454
      %v460 = vadd.s32 %v457, %v455
      %v461 = vadd.s32 %v457, %v456
      %vm462 = vcmp.ne.s32.totalorder %v317, 255
      %vm463 = vcmp.ne.s32.totalorder %v318, 255
      %vm464 = vcmp.ne.s32.totalorder %v319, 255
      %vm465 = vcmp.ne.s32.totalorder %v320, 255
      %vm466 = vcmp.lt.s32.totalorder %v458, 32
      %vm467 = vcmp.lt.s32.totalorder %v459, 32
      %vm468 = vcmp.lt.s32.totalorder %v460, 32
      %vm469 = vcmp.lt.s32.totalorder %v461, 32
      %vm470 = vmand %vm462, %vm466
      %vm471 = vmand %vm463, %vm467
      %vm472 = vmand %vm464, %vm468
      %vm473 = vmand %vm465, %vm469
      %v474 = vlog2.pop %v447
      %v475 = vmul.f32 %v474, 0.6931472
      %v476 = vlog2.pop %v448
      %v477 = vmul.f32 %v476, 0.6931472
      %v478 = vlog2.pop %v449
      %v479 = vmul.f32 %v478, 0.6931472
      %v480 = vlog2.pop %v450
      %v481 = vmul.f32 %v480, 0.6931472
      %v482 = vadd.f32 %v375, %v475
      %v483 = vadd.f32 %v376, %v477
      %v484 = vadd.f32 %v377, %v479
      %v485 = vadd.f32 %v378, %v481
      %v486 = vsub.f32 %v482, %v383
      %v487 = vsub.f32 %v483, %v384
      %v488 = vsub.f32 %v484, %v385
      %v489 = vsub.f32 %v485, %v386
      %v490 = vsel %vm470, %v486, 0.0
      %v491 = vsel %vm471, %v487, 0.0
      %v492 = vsel %vm472, %v488, 0.0
      %v493 = vsel %vm473, %v489, 0.0
      %v494 = vsel %vm470, 1, 0
      %v495 = vsel %vm471, 1, 0
      %v496 = vsel %vm472, 1, 0
      %v497 = vsel %vm473, 1, 0
      %v498 = vcvt.s32.f32 %v494
      %v499 = vcvt.s32.f32 %v495
      %v500 = vcvt.s32.f32 %v496
      %v501 = vcvt.s32.f32 %v497
      %v502 = vadd.f32 %v490, 0.0
      %v503 = vadd.f32 %v498, 0.0
      %v504 = vadd.f32 %v502, %v491
      %v505 = vadd.f32 %v503, %v499
      %v506 = vadd.f32 %v504, %v492
      %v507 = vadd.f32 %v505, %v500
      %v508 = vadd.f32 %v506, %v493
      %v509 = vadd.f32 %v507, %v501
      %v510 = vld [vmem:[%s301] sm:$0xff]
      %v511 = vadd.f32 %v510, %v508
      %512 = vst [vmem:[%s301] sm:$0xff] %v511
      %v513 = vld [vmem:[%s308] sm:$0xff]
      %v514 = vadd.f32 %v513, %v509
      %515 = vst [vmem:[%s308] sm:$0xff] %v514
      %p516 = scmp.lt.s32.totalorder %s20, 1
      %s517 = scalar_select %p516, %s20, 1
      %p518 = scmp.lt.s32.totalorder %s21, 0
      %s519 = scalar_select %p518, %s21, 0
      %s520 = sadd.s32 %s519, %s517
      %s521 = smul.addr %s520, 8
      %s522 = scalar_lea.vmem %s2, %s521
      %p523 = scmp.lt.s32.totalorder %s20, 1
      %s524 = scalar_select %p523, %s20, 1
      %p525 = scmp.lt.s32.totalorder %s21, 0
      %s526 = scalar_select %p525, %s21, 0
      %s527 = sadd.s32 %s526, %s524
      %s528 = smul.addr %s527, 8
      %s529 = scalar_lea.vmem %s3, %s528
      // Predicated region
      $region33: #{cross_entropy_loss_2d.1} parent=27 // pred_check
        %p530 = pneg %p122
      $region34: #{cross_entropy_loss_2d.1} parent=27 // pred_check_branch
        %532 = sbr.rel (%p530) target = $region36
      $region35: #{cross_entropy_loss_2d.1} parent=27 // pred_region
        _
      $region36: #{cross_entropy_loss_2d.1} parent=27 // pred_fallthru
        _
      // Predicated region
      $region37: #{cross_entropy_loss_2d.1} parent=27 // pred_check
        %p533 = pneg %p150
      $region38: #{cross_entropy_loss_2d.1} parent=27 // pred_check_branch
        %535 = sbr.rel (%p533) target = $region40
      $region39: #{cross_entropy_loss_2d.1} parent=27 // pred_region
        _
      $region40: #{cross_entropy_loss_2d.1} parent=27 // pred_fallthru
        _
    $region28: #{cross_entropy_loss_2d.1} parent=5 // pred_fallthru
      _
    %p536 = scmp.le.s32.totalorder 2, %s10
    // Predicated region
    $region41: #{cross_entropy_loss_2d.1} parent=5 // pred_check
      %p537 = pneg %p536
    $region42: #{cross_entropy_loss_2d.1} parent=5 // pred_check_branch
      %539 = sbr.rel (%p537) target = $region44
    $region43: #{cross_entropy_loss_2d.1} parent=5 // pred_region
      %s540 = ssub.s32 %s10, 2
      // Predicated region
      $region45: #{cross_entropy_loss_2d.1} parent=43 // pred_check
        %p541 = pneg %p128
      $region46: #{cross_entropy_loss_2d.1} parent=43 // pred_check_branch
        %543 = sbr.rel (%p541) target = $region48
      $region47: #{cross_entropy_loss_2d.1} parent=43 // pred_region
        %p544 = scmp.lt.s32.totalorder %s23, 1
        %s545 = scalar_select %p544, %s23, 1
        %p546 = scmp.lt.s32.totalorder %s24, 0
        %s547 = scalar_select %p546, %s24, 0
        %s548 = sadd.s32 %s547, %s545
        %s549 = smul.addr %s548, 8
        %s550 = scalar_lea.vmem %s2, %s549
      $region48: #{cross_entropy_loss_2d.1} parent=43 // pred_fallthru
        _
      // Predicated region
      $region49: #{cross_entropy_loss_2d.1} parent=43 // pred_check
        %p551 = pneg %p156
      $region50: #{cross_entropy_loss_2d.1} parent=43 // pred_check_branch
        %553 = sbr.rel (%p551) target = $region52
      $region51: #{cross_entropy_loss_2d.1} parent=43 // pred_region
        %p554 = scmp.lt.s32.totalorder %s23, 1
        %s555 = scalar_select %p554, %s23, 1
        %p556 = scmp.lt.s32.totalorder %s24, 0
        %s557 = scalar_select %p556, %s24, 0
        %s558 = sadd.s32 %s557, %s555
        %s559 = smul.addr %s558, 8
        %s560 = scalar_lea.vmem %s3, %s559
      $region52: #{cross_entropy_loss_2d.1} parent=43 // pred_fallthru
        _
    $region44: #{cross_entropy_loss_2d.1} parent=5 // pred_fallthru
      _
  $region6: #{cross_entropy_loss_2d.1} parent=0 // loop_footer
    %s14 = sadd.s32 1, %s10
  $region7: #{cross_entropy_loss_2d.1} parent=0 // loop_footer_branch
    %9 = sbr.rel target = $region3
  $region8: #{cross_entropy_loss_2d.1} parent=0 // loop_exit
    _

</llo_original>
